<compile_context>
chip_gen: v7x
topology: tpu7x:2x2x1
jax: 0.10.0
libtpu: 0.0.40
codegen_flags: <defaults>
</compile_context>

<pallas_src>
import functools

import jax
import jax.numpy as jnp
from jax.experimental import pallas as pl
from jax.experimental.pallas import tpu as pltpu


def _dense_T(hT, w, b):
    """out[n, t] = sum_k w[n, k] * hT[k, t] + b[n]  (pure VPU broadcast-FMA)."""
    K = hT.shape[0]
    acc = w[:, 0:1] * hT[0:1, :] + b             # (N,1)*(1,TB) + (N,1) -> (N,TB)
    for k in range(1, K):                        # K <= 9, unrolled at trace time
        acc = acc + w[:, k:k + 1] * hT[k:k + 1, :]
    return acc


def mlp_kernel(x_ref, w1_ref, b1_ref, w2_ref, b2_ref, w3_ref, b3_ref, o_ref):
    xT = x_ref[...]                                                   # (IN, TB)
    h1 = jnp.maximum(_dense_T(xT, w1_ref[...], b1_ref[...]), 0.0)     # (H1, TB)
    h2 = jnp.maximum(_dense_T(h1, w2_ref[...], b2_ref[...]), 0.0)     # (H2, TB)
    o_ref[...] = _dense_T(h2, w3_ref[...], b3_ref[...]).astype(o_ref.dtype)


@functools.partial(jax.jit, static_argnames=("tb",))
def mlp_forward(x, params, *, tb=2048):
    """x: [B, in_features]; params in PyTorch layout (w: [out, in], b: [out])."""
    w1, b1, w2, b2, w3, b3 = params
    B, in_features = x.shape
    out_features = w3.shape[0]

    # Lane-dense layout: batch on the last (lane) axis.  Pad B up so every
    # tile is a multiple of 128 lanes -> all stores are full, unmasked writes.
    b128 = 128 * pl.cdiv(B, 128)
    tb = min(tb, b128)
    bp = tb * pl.cdiv(b128, tb)

    # Single fused pad+transpose copy in the wrapper (no-op pad when aligned).
    xT = jnp.pad(x, ((0, bp - B), (0, 0))).T                          # (IN, Bp)
    b1c, b2c, b3c = b1.reshape(-1, 1), b2.reshape(-1, 1), b3.reshape(-1, 1)

    const = lambda i: (0, 0)   # weights/biases stay VMEM-resident across the grid
    outT = pl.pallas_call(
        mlp_kernel,
        out_shape=jax.ShapeDtypeStruct((out_features, bp), jnp.float32),
        grid=(bp // tb,),
        in_specs=[
            pl.BlockSpec((in_features, tb), lambda i: (0, i)),
            pl.BlockSpec(w1.shape, const),
            pl.BlockSpec(b1c.shape, const),
            pl.BlockSpec(w2.shape, const),
            pl.BlockSpec(b2c.shape, const),
            pl.BlockSpec(w3.shape, const),
            pl.BlockSpec(b3c.shape, const),
        ],
        out_specs=pl.BlockSpec((out_features, tb), lambda i: (0, i)),
        compiler_params=pltpu.CompilerParams(
            dimension_semantics=("parallel",)),
    )(xT, w1, b1c, w2, b2c, w3, b3c)

    return outT[:, :B].T


def init_params(key, in_features=4, h1=8, h2=9, out_features=3):
    """Deterministic init mimicking PyTorch Linear's U(-1/sqrt(fan_in), ...)."""
    ks = jax.random.split(key, 6)

    def linear_init(kw, kb, fan_in, fan_out):
        bound = 1.0 / (fan_in ** 0.5)
        w = jax.random.uniform(kw, (fan_out, fan_in), jnp.float32, -bound, bound)
        b = jax.random.uniform(kb, (fan_out,), jnp.float32, -bound, bound)
        return w, b

    w1, b1 = linear_init(ks[0], ks[1], in_features, h1)
    w2, b2 = linear_init(ks[2], ks[3], h1, h2)
    w3, b3 = linear_init(ks[4], ks[5], h2, out_features)
    return (w1, b1, w2, b2, w3, b3)


def mlp_ref(x, params):
    """Pure-JAX reference with PyTorch semantics y = x W^T + b."""
    w1, b1, w2, b2, w3, b3 = params
    h = jnp.maximum(x @ w1.T + b1, 0.0)
    h = jnp.maximum(h @ w2.T + b2, 0.0)
    return h @ w3.T + b3


if __name__ == "__main__":
    key = jax.random.PRNGKey(0)
    k_x, k_x2, k_p = jax.random.split(key, 3)

    params = init_params(k_p, in_features=4, h1=8, h2=9, out_features=3)

    # Primary check: batch that tiles evenly on 128 lanes.
    x = jax.random.normal(k_x, (256, 4), dtype=jnp.float32)
    out = jax.block_until_ready(mlp_forward(x, params))
    assert out.shape == (256, 3)
    assert jnp.allclose(out, mlp_ref(x, params), atol=1e-5, rtol=1e-5), \
        "mismatch vs reference (even batch)"

    # Ragged batch exercises the lane-padding path.
    x2 = jax.random.normal(k_x2, (200, 4), dtype=jnp.float32)
    out2 = jax.block_until_ready(mlp_forward(x2, params))
    assert out2.shape == (200, 3)
    assert jnp.allclose(out2, mlp_ref(x2, params), atol=1e-5, rtol=1e-5), \
        "mismatch vs reference (ragged batch)"

    print("KERNEL_OK")
</pallas_src>

<mosaic_0001>
module attributes {stable_mosaic.version = 11 : i64} {
  func.func @mlp_kernel(%arg0: i32, %arg1: memref<4x256xf32, #tpu.memory_space<vmem>>, %arg2: memref<8x4xf32, #tpu.memory_space<vmem>>, %arg3: memref<8x1xf32, #tpu.memory_space<vmem>>, %arg4: memref<9x8xf32, #tpu.memory_space<vmem>>, %arg5: memref<9x1xf32, #tpu.memory_space<vmem>>, %arg6: memref<3x9xf32, #tpu.memory_space<vmem>>, %arg7: memref<3x1xf32, #tpu.memory_space<vmem>>, %arg8: memref<3x256xf32, #tpu.memory_space<vmem>>) attributes {dimension_semantics = [#tpu.dimension_semantics<parallel>], iteration_bounds = array<i64: 1>, scalar_prefetch = 0 : i64, scratch_operands = 0 : i64, tpu.core_type = #tpu.core_type<tc>, window_params = [{transform_indices = @transform_0, window_bounds = array<i64: 4, 256>}, {pipeline_mode = #tpu.pipeline_mode<synchronous>, transform_indices = @transform_1, window_bounds = array<i64: 8, 4>}, {pipeline_mode = #tpu.pipeline_mode<synchronous>, transform_indices = @transform_2, window_bounds = array<i64: 8, 1>}, {pipeline_mode = #tpu.pipeline_mode<synchronous>, transform_indices = @transform_3, window_bounds = array<i64: 9, 8>}, {pipeline_mode = #tpu.pipeline_mode<synchronous>, transform_indices = @transform_4, window_bounds = array<i64: 9, 1>}, {pipeline_mode = #tpu.pipeline_mode<synchronous>, transform_indices = @transform_5, window_bounds = array<i64: 3, 9>}, {pipeline_mode = #tpu.pipeline_mode<synchronous>, transform_indices = @transform_6, window_bounds = array<i64: 3, 1>}, {transform_indices = @transform_7, window_bounds = array<i64: 3, 256>}]} {
    %c0 = arith.constant 0 : index
    %c0_0 = arith.constant 0 : index
    %0 = vector.load %arg1[%c0, %c0_0] : memref<4x256xf32, #tpu.memory_space<vmem>>, vector<4x256xf32>
    %c0_1 = arith.constant 0 : index
    %c0_2 = arith.constant 0 : index
    %1 = vector.load %arg2[%c0_1, %c0_2] : memref<8x4xf32, #tpu.memory_space<vmem>>, vector<8x4xf32>
    %c0_3 = arith.constant 0 : index
    %c0_4 = arith.constant 0 : index
    %2 = vector.load %arg3[%c0_3, %c0_4] : memref<8x1xf32, #tpu.memory_space<vmem>>, vector<8x1xf32>
    %3 = vector.extract_strided_slice %1 {offsets = [0, 0], sizes = [8, 1], strides = [1, 1]} : vector<8x4xf32> to vector<8x1xf32>
    %4 = vector.extract_strided_slice %0 {offsets = [0, 0], sizes = [1, 256], strides = [1, 1]} : vector<4x256xf32> to vector<1x256xf32>
    %5 = vector.broadcast %3 : vector<8x1xf32> to vector<8x256xf32>
    %6 = vector.broadcast %4 : vector<1x256xf32> to vector<8x256xf32>
    %7 = arith.mulf %5, %6 : vector<8x256xf32>
    %8 = vector.broadcast %2 : vector<8x1xf32> to vector<8x256xf32>
    %9 = arith.addf %7, %8 : vector<8x256xf32>
    %10 = vector.extract_strided_slice %1 {offsets = [0, 1], sizes = [8, 1], strides = [1, 1]} : vector<8x4xf32> to vector<8x1xf32>
    %11 = vector.extract_strided_slice %0 {offsets = [1, 0], sizes = [1, 256], strides = [1, 1]} : vector<4x256xf32> to vector<1x256xf32>
    %12 = vector.broadcast %10 : vector<8x1xf32> to vector<8x256xf32>
    %13 = vector.broadcast %11 : vector<1x256xf32> to vector<8x256xf32>
    %14 = arith.mulf %12, %13 : vector<8x256xf32>
    %15 = arith.addf %9, %14 : vector<8x256xf32>
    %16 = vector.extract_strided_slice %1 {offsets = [0, 2], sizes = [8, 1], strides = [1, 1]} : vector<8x4xf32> to vector<8x1xf32>
    %17 = vector.extract_strided_slice %0 {offsets = [2, 0], sizes = [1, 256], strides = [1, 1]} : vector<4x256xf32> to vector<1x256xf32>
    %18 = vector.broadcast %16 : vector<8x1xf32> to vector<8x256xf32>
    %19 = vector.broadcast %17 : vector<1x256xf32> to vector<8x256xf32>
    %20 = arith.mulf %18, %19 : vector<8x256xf32>
    %21 = arith.addf %15, %20 : vector<8x256xf32>
    %22 = vector.extract_strided_slice %1 {offsets = [0, 3], sizes = [8, 1], strides = [1, 1]} : vector<8x4xf32> to vector<8x1xf32>
    %23 = vector.extract_strided_slice %0 {offsets = [3, 0], sizes = [1, 256], strides = [1, 1]} : vector<4x256xf32> to vector<1x256xf32>
    %24 = vector.broadcast %22 : vector<8x1xf32> to vector<8x256xf32>
    %25 = vector.broadcast %23 : vector<1x256xf32> to vector<8x256xf32>
    %26 = arith.mulf %24, %25 : vector<8x256xf32>
    %27 = arith.addf %21, %26 : vector<8x256xf32>
    %cst = arith.constant 0.000000e+00 : f32
    %28 = vector.broadcast %cst : f32 to vector<8x256xf32>
    %29 = arith.maximumf %27, %28 : vector<8x256xf32>
    %c0_5 = arith.constant 0 : index
    %c0_6 = arith.constant 0 : index
    %30 = vector.load %arg4[%c0_5, %c0_6] : memref<9x8xf32, #tpu.memory_space<vmem>>, vector<9x8xf32>
    %c0_7 = arith.constant 0 : index
    %c0_8 = arith.constant 0 : index
    %31 = vector.load %arg5[%c0_7, %c0_8] : memref<9x1xf32, #tpu.memory_space<vmem>>, vector<9x1xf32>
    %32 = vector.extract_strided_slice %30 {offsets = [0, 0], sizes = [9, 1], strides = [1, 1]} : vector<9x8xf32> to vector<9x1xf32>
    %33 = vector.extract_strided_slice %29 {offsets = [0, 0], sizes = [1, 256], strides = [1, 1]} : vector<8x256xf32> to vector<1x256xf32>
    %34 = vector.broadcast %32 : vector<9x1xf32> to vector<9x256xf32>
    %35 = vector.broadcast %33 : vector<1x256xf32> to vector<9x256xf32>
    %36 = arith.mulf %34, %35 : vector<9x256xf32>
    %37 = vector.broadcast %31 : vector<9x1xf32> to vector<9x256xf32>
    %38 = arith.addf %36, %37 : vector<9x256xf32>
    %39 = vector.extract_strided_slice %30 {offsets = [0, 1], sizes = [9, 1], strides = [1, 1]} : vector<9x8xf32> to vector<9x1xf32>
    %40 = vector.extract_strided_slice %29 {offsets = [1, 0], sizes = [1, 256], strides = [1, 1]} : vector<8x256xf32> to vector<1x256xf32>
    %41 = vector.broadcast %39 : vector<9x1xf32> to vector<9x256xf32>
    %42 = vector.broadcast %40 : vector<1x256xf32> to vector<9x256xf32>
    %43 = arith.mulf %41, %42 : vector<9x256xf32>
    %44 = arith.addf %38, %43 : vector<9x256xf32>
    %45 = vector.extract_strided_slice %30 {offsets = [0, 2], sizes = [9, 1], strides = [1, 1]} : vector<9x8xf32> to vector<9x1xf32>
    %46 = vector.extract_strided_slice %29 {offsets = [2, 0], sizes = [1, 256], strides = [1, 1]} : vector<8x256xf32> to vector<1x256xf32>
    %47 = vector.broadcast %45 : vector<9x1xf32> to vector<9x256xf32>
    %48 = vector.broadcast %46 : vector<1x256xf32> to vector<9x256xf32>
    %49 = arith.mulf %47, %48 : vector<9x256xf32>
    %50 = arith.addf %44, %49 : vector<9x256xf32>
    %51 = vector.extract_strided_slice %30 {offsets = [0, 3], sizes = [9, 1], strides = [1, 1]} : vector<9x8xf32> to vector<9x1xf32>
    %52 = vector.extract_strided_slice %29 {offsets = [3, 0], sizes = [1, 256], strides = [1, 1]} : vector<8x256xf32> to vector<1x256xf32>
    %53 = vector.broadcast %51 : vector<9x1xf32> to vector<9x256xf32>
    %54 = vector.broadcast %52 : vector<1x256xf32> to vector<9x256xf32>
    %55 = arith.mulf %53, %54 : vector<9x256xf32>
    %56 = arith.addf %50, %55 : vector<9x256xf32>
    %57 = vector.extract_strided_slice %30 {offsets = [0, 4], sizes = [9, 1], strides = [1, 1]} : vector<9x8xf32> to vector<9x1xf32>
    %58 = vector.extract_strided_slice %29 {offsets = [4, 0], sizes = [1, 256], strides = [1, 1]} : vector<8x256xf32> to vector<1x256xf32>
    %59 = vector.broadcast %57 : vector<9x1xf32> to vector<9x256xf32>
    %60 = vector.broadcast %58 : vector<1x256xf32> to vector<9x256xf32>
    %61 = arith.mulf %59, %60 : vector<9x256xf32>
    %62 = arith.addf %56, %61 : vector<9x256xf32>
    %63 = vector.extract_strided_slice %30 {offsets = [0, 5], sizes = [9, 1], strides = [1, 1]} : vector<9x8xf32> to vector<9x1xf32>
    %64 = vector.extract_strided_slice %29 {offsets = [5, 0], sizes = [1, 256], strides = [1, 1]} : vector<8x256xf32> to vector<1x256xf32>
    %65 = vector.broadcast %63 : vector<9x1xf32> to vector<9x256xf32>
    %66 = vector.broadcast %64 : vector<1x256xf32> to vector<9x256xf32>
    %67 = arith.mulf %65, %66 : vector<9x256xf32>
    %68 = arith.addf %62, %67 : vector<9x256xf32>
    %69 = vector.extract_strided_slice %30 {offsets = [0, 6], sizes = [9, 1], strides = [1, 1]} : vector<9x8xf32> to vector<9x1xf32>
    %70 = vector.extract_strided_slice %29 {offsets = [6, 0], sizes = [1, 256], strides = [1, 1]} : vector<8x256xf32> to vector<1x256xf32>
    %71 = vector.broadcast %69 : vector<9x1xf32> to vector<9x256xf32>
    %72 = vector.broadcast %70 : vector<1x256xf32> to vector<9x256xf32>
    %73 = arith.mulf %71, %72 : vector<9x256xf32>
    %74 = arith.addf %68, %73 : vector<9x256xf32>
    %75 = vector.extract_strided_slice %30 {offsets = [0, 7], sizes = [9, 1], strides = [1, 1]} : vector<9x8xf32> to vector<9x1xf32>
    %76 = vector.extract_strided_slice %29 {offsets = [7, 0], sizes = [1, 256], strides = [1, 1]} : vector<8x256xf32> to vector<1x256xf32>
    %77 = vector.broadcast %75 : vector<9x1xf32> to vector<9x256xf32>
    %78 = vector.broadcast %76 : vector<1x256xf32> to vector<9x256xf32>
    %79 = arith.mulf %77, %78 : vector<9x256xf32>
    %80 = arith.addf %74, %79 : vector<9x256xf32>
    %cst_9 = arith.constant 0.000000e+00 : f32
    %81 = vector.broadcast %cst_9 : f32 to vector<9x256xf32>
    %82 = arith.maximumf %80, %81 : vector<9x256xf32>
    %c0_10 = arith.constant 0 : index
    %c0_11 = arith.constant 0 : index
    %83 = vector.load %arg6[%c0_10, %c0_11] : memref<3x9xf32, #tpu.memory_space<vmem>>, vector<3x9xf32>
    %c0_12 = arith.constant 0 : index
    %c0_13 = arith.constant 0 : index
    %84 = vector.load %arg7[%c0_12, %c0_13] : memref<3x1xf32, #tpu.memory_space<vmem>>, vector<3x1xf32>
    %85 = vector.extract_strided_slice %83 {offsets = [0, 0], sizes = [3, 1], strides = [1, 1]} : vector<3x9xf32> to vector<3x1xf32>
    %86 = vector.extract_strided_slice %82 {offsets = [0, 0], sizes = [1, 256], strides = [1, 1]} : vector<9x256xf32> to vector<1x256xf32>
    %87 = vector.broadcast %85 : vector<3x1xf32> to vector<3x256xf32>
    %88 = vector.broadcast %86 : vector<1x256xf32> to vector<3x256xf32>
    %89 = arith.mulf %87, %88 : vector<3x256xf32>
    %90 = vector.broadcast %84 : vector<3x1xf32> to vector<3x256xf32>
    %91 = arith.addf %89, %90 : vector<3x256xf32>
    %92 = vector.extract_strided_slice %83 {offsets = [0, 1], sizes = [3, 1], strides = [1, 1]} : vector<3x9xf32> to vector<3x1xf32>
    %93 = vector.extract_strided_slice %82 {offsets = [1, 0], sizes = [1, 256], strides = [1, 1]} : vector<9x256xf32> to vector<1x256xf32>
    %94 = vector.broadcast %92 : vector<3x1xf32> to vector<3x256xf32>
    %95 = vector.broadcast %93 : vector<1x256xf32> to vector<3x256xf32>
    %96 = arith.mulf %94, %95 : vector<3x256xf32>
    %97 = arith.addf %91, %96 : vector<3x256xf32>
    %98 = vector.extract_strided_slice %83 {offsets = [0, 2], sizes = [3, 1], strides = [1, 1]} : vector<3x9xf32> to vector<3x1xf32>
    %99 = vector.extract_strided_slice %82 {offsets = [2, 0], sizes = [1, 256], strides = [1, 1]} : vector<9x256xf32> to vector<1x256xf32>
    %100 = vector.broadcast %98 : vector<3x1xf32> to vector<3x256xf32>
    %101 = vector.broadcast %99 : vector<1x256xf32> to vector<3x256xf32>
    %102 = arith.mulf %100, %101 : vector<3x256xf32>
    %103 = arith.addf %97, %102 : vector<3x256xf32>
    %104 = vector.extract_strided_slice %83 {offsets = [0, 3], sizes = [3, 1], strides = [1, 1]} : vector<3x9xf32> to vector<3x1xf32>
    %105 = vector.extract_strided_slice %82 {offsets = [3, 0], sizes = [1, 256], strides = [1, 1]} : vector<9x256xf32> to vector<1x256xf32>
    %106 = vector.broadcast %104 : vector<3x1xf32> to vector<3x256xf32>
    %107 = vector.broadcast %105 : vector<1x256xf32> to vector<3x256xf32>
    %108 = arith.mulf %106, %107 : vector<3x256xf32>
    %109 = arith.addf %103, %108 : vector<3x256xf32>
    %110 = vector.extract_strided_slice %83 {offsets = [0, 4], sizes = [3, 1], strides = [1, 1]} : vector<3x9xf32> to vector<3x1xf32>
    %111 = vector.extract_strided_slice %82 {offsets = [4, 0], sizes = [1, 256], strides = [1, 1]} : vector<9x256xf32> to vector<1x256xf32>
    %112 = vector.broadcast %110 : vector<3x1xf32> to vector<3x256xf32>
    %113 = vector.broadcast %111 : vector<1x256xf32> to vector<3x256xf32>
    %114 = arith.mulf %112, %113 : vector<3x256xf32>
    %115 = arith.addf %109, %114 : vector<3x256xf32>
    %116 = vector.extract_strided_slice %83 {offsets = [0, 5], sizes = [3, 1], strides = [1, 1]} : vector<3x9xf32> to vector<3x1xf32>
    %117 = vector.extract_strided_slice %82 {offsets = [5, 0], sizes = [1, 256], strides = [1, 1]} : vector<9x256xf32> to vector<1x256xf32>
    %118 = vector.broadcast %116 : vector<3x1xf32> to vector<3x256xf32>
    %119 = vector.broadcast %117 : vector<1x256xf32> to vector<3x256xf32>
    %120 = arith.mulf %118, %119 : vector<3x256xf32>
    %121 = arith.addf %115, %120 : vector<3x256xf32>
    %122 = vector.extract_strided_slice %83 {offsets = [0, 6], sizes = [3, 1], strides = [1, 1]} : vector<3x9xf32> to vector<3x1xf32>
    %123 = vector.extract_strided_slice %82 {offsets = [6, 0], sizes = [1, 256], strides = [1, 1]} : vector<9x256xf32> to vector<1x256xf32>
    %124 = vector.broadcast %122 : vector<3x1xf32> to vector<3x256xf32>
    %125 = vector.broadcast %123 : vector<1x256xf32> to vector<3x256xf32>
    %126 = arith.mulf %124, %125 : vector<3x256xf32>
    %127 = arith.addf %121, %126 : vector<3x256xf32>
    %128 = vector.extract_strided_slice %83 {offsets = [0, 7], sizes = [3, 1], strides = [1, 1]} : vector<3x9xf32> to vector<3x1xf32>
    %129 = vector.extract_strided_slice %82 {offsets = [7, 0], sizes = [1, 256], strides = [1, 1]} : vector<9x256xf32> to vector<1x256xf32>
    %130 = vector.broadcast %128 : vector<3x1xf32> to vector<3x256xf32>
    %131 = vector.broadcast %129 : vector<1x256xf32> to vector<3x256xf32>
    %132 = arith.mulf %130, %131 : vector<3x256xf32>
    %133 = arith.addf %127, %132 : vector<3x256xf32>
    %134 = vector.extract_strided_slice %83 {offsets = [0, 8], sizes = [3, 1], strides = [1, 1]} : vector<3x9xf32> to vector<3x1xf32>
    %135 = vector.extract_strided_slice %82 {offsets = [8, 0], sizes = [1, 256], strides = [1, 1]} : vector<9x256xf32> to vector<1x256xf32>
    %136 = vector.broadcast %134 : vector<3x1xf32> to vector<3x256xf32>
    %137 = vector.broadcast %135 : vector<1x256xf32> to vector<3x256xf32>
    %138 = arith.mulf %136, %137 : vector<3x256xf32>
    %139 = arith.addf %133, %138 : vector<3x256xf32>
    %c0_14 = arith.constant 0 : index
    %c0_15 = arith.constant 0 : index
    %140 = vector.load %arg8[%c0_14, %c0_15] : memref<3x256xf32, #tpu.memory_space<vmem>>, vector<3x256xf32>
    tpu.vector_store %arg8[%c0_14, %c0_15], %139 {strides = array<i32>} : memref<3x256xf32, #tpu.memory_space<vmem>>, vector<3x256xf32>,
    return
  }
  func.func @transform_0(%arg0: i32) -> (i32, i32) {
    %c0_i32 = arith.constant 0 : i32
    %c0_i32_0 = arith.constant 0 : i32
    return %c0_i32, %arg0 : i32, i32
  }
  func.func @transform_1(%arg0: i32) -> (i32, i32) {
    %c0_i32 = arith.constant 0 : i32
    %c0_i32_0 = arith.constant 0 : i32
    %c0_i32_1 = arith.constant 0 : i32
    return %c0_i32, %c0_i32_0 : i32, i32
  }
  func.func @transform_2(%arg0: i32) -> (i32, i32) {
    %c0_i32 = arith.constant 0 : i32
    %c0_i32_0 = arith.constant 0 : i32
    %c0_i32_1 = arith.constant 0 : i32
    return %c0_i32, %c0_i32_0 : i32, i32
  }
  func.func @transform_3(%arg0: i32) -> (i32, i32) {
    %c0_i32 = arith.constant 0 : i32
    %c0_i32_0 = arith.constant 0 : i32
    %c0_i32_1 = arith.constant 0 : i32
    return %c0_i32, %c0_i32_0 : i32, i32
  }
  func.func @transform_4(%arg0: i32) -> (i32, i32) {
    %c0_i32 = arith.constant 0 : i32
    %c0_i32_0 = arith.constant 0 : i32
    %c0_i32_1 = arith.constant 0 : i32
    return %c0_i32, %c0_i32_0 : i32, i32
  }
  func.func @transform_5(%arg0: i32) -> (i32, i32) {
    %c0_i32 = arith.constant 0 : i32
    %c0_i32_0 = arith.constant 0 : i32
    %c0_i32_1 = arith.constant 0 : i32
    return %c0_i32, %c0_i32_0 : i32, i32
  }
  func.func @transform_6(%arg0: i32) -> (i32, i32) {
    %c0_i32 = arith.constant 0 : i32
    %c0_i32_0 = arith.constant 0 : i32
    %c0_i32_1 = arith.constant 0 : i32
    return %c0_i32, %c0_i32_0 : i32, i32
  }
  func.func @transform_7(%arg0: i32) -> (i32, i32) {
    %c0_i32 = arith.constant 0 : i32
    %c0_i32_0 = arith.constant 0 : i32
    return %c0_i32, %arg0 : i32, i32
  }
}

</mosaic_0001>

<llo_original>
// kernel: mlp_forward.1
$region0: #{mlp_forward.1}
  #allocation0 [shape = 'u32[]', space=smem, size = 0x4, offset = 0x4, fixed_abs, tag = 'smem constant byte address 0x4 - core index']
  #allocation1 [shape = 'u32[144,128]{1,0:T(1,128)}', space=vmem, size = 0x12000, scoped, tag = 'internal scratch']
  %s0 = inlined_call_operand.vmem [shape: f32[4,256], index: 0, kind: input, shape index: {}]
  %s1 = inlined_call_operand.vmem [shape: f32[8,4], index: 1, kind: input, shape index: {}]
  %s2 = inlined_call_operand.vmem [shape: f32[8,1], index: 2, kind: input, shape index: {}]
  %s3 = inlined_call_operand.vmem [shape: f32[9,8], index: 3, kind: input, shape index: {}]
  %s4 = inlined_call_operand.vmem [shape: f32[9,1], index: 4, kind: input, shape index: {}]
  %s5 = inlined_call_operand.vmem [shape: f32[3,9], index: 5, kind: input, shape index: {}]
  %s6 = inlined_call_operand.vmem [shape: f32[3,1], index: 6, kind: input, shape index: {}]
  %s7 = inlined_call_operand.hbm [shape: f32[3,256], index: 7, kind: output, shape index: {}]
  %s8 = sld [smem:[#allocation0]]
  $region38: #{mlp_forward.1} parent=0
    _
  %s10 = ssub.s32 1, %s8
  %s11 = scalar_select 0, %s10, %s8
  $region1: #{mlp_forward.1} parent=0
    #allocation2 [shape = 'u8[4096]{0}', space=vmem, size = 0x1000, scoped, tag = 'output window, operand 0, single buffered']
    #allocation3 [shape = 's32[1]{0}', space=sflag, size = 0x4, scoped, tag = 'scoped memory for mlp_forward.1']
    %12 = vsyncpa [#allocation3], 0
    // Predicated region
    $region2: #{mlp_forward.1} parent=1 // pred_check
      _
    $region3: #{mlp_forward.1} parent=1 // pred_check_branch
      %14 = sbr.rel (0) target = $region5
    $region4: #{mlp_forward.1} parent=1 // pred_region
      _
    $region5: #{mlp_forward.1} parent=1 // pred_fallthru
      _
    // Predicated region
    $region6: #{mlp_forward.1} parent=1 // pred_check
      _
    $region7: #{mlp_forward.1} parent=1 // pred_check_branch
      %16 = sbr.rel (0) target = $region9
    $region8: #{mlp_forward.1} parent=1 // pred_region
      _
    $region9: #{mlp_forward.1} parent=1 // pred_fallthru
      _
    // Predicated region
    $region10: #{mlp_forward.1} parent=1 // pred_check
      _
    $region11: #{mlp_forward.1} parent=1 // pred_check_branch
      %18 = sbr.rel (0) target = $region13
    $region12: #{mlp_forward.1} parent=1 // pred_region
      _
    $region13: #{mlp_forward.1} parent=1 // pred_fallthru
      _
    // Predicated region
    $region14: #{mlp_forward.1} parent=1 // pred_check
      _
    $region15: #{mlp_forward.1} parent=1 // pred_check_branch
      %20 = sbr.rel (0) target = $region17
    $region16: #{mlp_forward.1} parent=1 // pred_region
      _
    $region17: #{mlp_forward.1} parent=1 // pred_fallthru
      _
    // Predicated region
    $region18: #{mlp_forward.1} parent=1 // pred_check
      _
    $region19: #{mlp_forward.1} parent=1 // pred_check_branch
      %22 = sbr.rel (0) target = $region21
    $region20: #{mlp_forward.1} parent=1 // pred_region
      _
    $region21: #{mlp_forward.1} parent=1 // pred_fallthru
      _
    // Predicated region
    $region22: #{mlp_forward.1} parent=1 // pred_check
      _
    $region23: #{mlp_forward.1} parent=1 // pred_check_branch
      %24 = sbr.rel (0) target = $region25
    $region24: #{mlp_forward.1} parent=1 // pred_region
      _
    $region25: #{mlp_forward.1} parent=1 // pred_fallthru
      _
    // Predicated region
    $region26: #{mlp_forward.1} parent=1 // pred_check
      _
    $region27: #{mlp_forward.1} parent=1 // pred_check_branch
      %26 = sbr.rel (0) target = $region29
    $region28: #{mlp_forward.1} parent=1 // pred_region
      _
    $region29: #{mlp_forward.1} parent=1 // pred_fallthru
      _
    %v27 = vld [vmem:[%s0] sm:$0xff]
    %v28 = vld [vmem:[%s1] sm:$0xff]
    %v29 = vld [vmem:[%s2] sm:$0xff]
    %31 = vset.pattern.permute.xlu0 0
    %32 = vperm.xlu0 %31, %v28
    %v33 = vpop.permute.xlu0 %32
    %v36 = vlaneseq
    %v37 = vshrl.u32 %v36, 7
    %v38 = vsub.s32 0, %v37
    %v39 = vrot.slane %v27, %v38
    %v40 = vlaneseq
    %v41 = vshrl.u32 %v40, 7
    %v42 = vsub.s32 4, %v41
    %v43 = vrot.slane %v27, %v42
    %v46 = vlaneseq
    %v47 = vshrl.u32 %v46, 7
    %v48 = vsub.s32 0, %v47
    %v49 = vrot.slane %v39, %v48
    %v50 = vlaneseq
    %v51 = vshrl.u32 %v50, 7
    %v52 = vsub.s32 0, %v51
    %v53 = vrot.slane %v43, %v52
    %v54 = vmul.f32 %v33, %v49
    %v55 = vmul.f32 %v33, %v53
    %57 = vset.pattern.permute.xlu0 0
    %58 = vperm.xlu0 %57, %v29
    %v59 = vpop.permute.xlu0 %58
    %v61 = vadd.f32 %v54, %v59
    %v62 = vadd.f32 %v55, %v59
    %63 = vset.pattern.permute.xlu0 1
    %64 = vperm.xlu0 %63, %v28
    %v65 = vpop.permute.xlu0 %64
    %v67 = vlaneseq
    %v68 = vshrl.u32 %v67, 7
    %v69 = vsub.s32 1, %v68
    %v70 = vrot.slane %v27, %v69
    %v71 = vlaneseq
    %v72 = vshrl.u32 %v71, 7
    %v73 = vsub.s32 5, %v72
    %v74 = vrot.slane %v27, %v73
    %v77 = vlaneseq
    %v78 = vshrl.u32 %v77, 7
    %v79 = vsub.s32 1, %v78
    %v80 = vrot.slane %v70, %v79
    %v81 = vlaneseq
    %v82 = vshrl.u32 %v81, 7
    %v83 = vsub.s32 1, %v82
    %v84 = vrot.slane %v74, %v83
    %v85 = vmul.f32 %v65, %v80
    %v86 = vmul.f32 %v65, %v84
    %v87 = vadd.f32 %v61, %v85
    %v88 = vadd.f32 %v62, %v86
    %89 = vset.pattern.permute.xlu0 2
    %90 = vperm.xlu0 %89, %v28
    %v91 = vpop.permute.xlu0 %90
    %v93 = vlaneseq
    %v94 = vshrl.u32 %v93, 7
    %v95 = vsub.s32 2, %v94
    %v96 = vrot.slane %v27, %v95
    %v97 = vlaneseq
    %v98 = vshrl.u32 %v97, 7
    %v99 = vsub.s32 6, %v98
    %v100 = vrot.slane %v27, %v99
    %v103 = vlaneseq
    %v104 = vshrl.u32 %v103, 7
    %v105 = vsub.s32 2, %v104
    %v106 = vrot.slane %v96, %v105
    %v107 = vlaneseq
    %v108 = vshrl.u32 %v107, 7
    %v109 = vsub.s32 2, %v108
    %v110 = vrot.slane %v100, %v109
    %v111 = vmul.f32 %v91, %v106
    %v112 = vmul.f32 %v91, %v110
    %v113 = vadd.f32 %v87, %v111
    %v114 = vadd.f32 %v88, %v112
    %115 = vset.pattern.permute.xlu0 3
    %116 = vperm.xlu0 %115, %v28
    %v117 = vpop.permute.xlu0 %116
    %v119 = vlaneseq
    %v120 = vshrl.u32 %v119, 7
    %v121 = vsub.s32 3, %v120
    %v122 = vrot.slane %v27, %v121
    %v123 = vlaneseq
    %v124 = vshrl.u32 %v123, 7
    %v125 = vsub.s32 7, %v124
    %v126 = vrot.slane %v27, %v125
    %v129 = vlaneseq
    %v130 = vshrl.u32 %v129, 7
    %v131 = vsub.s32 3, %v130
    %v132 = vrot.slane %v122, %v131
    %v133 = vlaneseq
    %v134 = vshrl.u32 %v133, 7
    %v135 = vsub.s32 3, %v134
    %v136 = vrot.slane %v126, %v135
    %v137 = vmul.f32 %v117, %v132
    %v138 = vmul.f32 %v117, %v136
    %v139 = vadd.f32 %v113, %v137
    %v140 = vadd.f32 %v114, %v138
    %v141 = vmax.f32 %v139, 0.0
    %v142 = vmax.f32 %v140, 0.0
    %v143 = vld [vmem:[%s3] sm:$0xff]
    %v144 = vld [vmem:[%s3 + $0x8] sm:$0x1]
    %v145 = vld [vmem:[%s4] sm:$0xff]
    %v146 = vld [vmem:[%s4 + $0x8] sm:$0x1]
    %148 = vset.pattern.permute.xlu0 0
    %149 = vperm.xlu0 %148, %v143
    %v150 = vpop.permute.xlu0 %149
    %153 = vset.pattern.permute.xlu0 0
    %154 = vperm.xlu0 %153, %v144
    %v155 = vpop.permute.xlu0 %154
    %v157 = vlaneseq
    %v158 = vshrl.u32 %v157, 7
    %v159 = vsub.s32 0, %v158
    %v160 = vrot.slane %v141, %v159
    %v161 = vlaneseq
    %v162 = vshrl.u32 %v161, 7
    %v163 = vsub.s32 0, %v162
    %v164 = vrot.slane %v142, %v163
    %v165 = vmul.f32 %v150, %v160
    %v166 = vmul.f32 %v150, %v164
    %v167 = vmul.f32 %v155, %v160
    %v168 = vmul.f32 %v155, %v164
    %170 = vset.pattern.permute.xlu0 0
    %171 = vperm.xlu0 %170, %v145
    %v172 = vpop.permute.xlu0 %171
    %175 = vset.pattern.permute.xlu0 0
    %176 = vperm.xlu0 %175, %v146
    %v177 = vpop.permute.xlu0 %176
    %v179 = vadd.f32 %v165, %v172
    %v180 = vadd.f32 %v166, %v172
    %v181 = vadd.f32 %v167, %v177
    %v182 = vadd.f32 %v168, %v177
    %183 = vset.pattern.permute.xlu0 1
    %184 = vperm.xlu0 %183, %v143
    %v185 = vpop.permute.xlu0 %184
    %187 = vset.pattern.permute.xlu0 1
    %188 = vperm.xlu0 %187, %v144
    %v189 = vpop.permute.xlu0 %188
    %v191 = vlaneseq
    %v192 = vshrl.u32 %v191, 7
    %v193 = vsub.s32 1, %v192
    %v194 = vrot.slane %v141, %v193
    %v195 = vlaneseq
    %v196 = vshrl.u32 %v195, 7
    %v197 = vsub.s32 1, %v196
    %v198 = vrot.slane %v142, %v197
    %v199 = vmul.f32 %v185, %v194
    %v200 = vmul.f32 %v185, %v198
    %v201 = vmul.f32 %v189, %v194
    %v202 = vmul.f32 %v189, %v198
    %v203 = vadd.f32 %v179, %v199
    %v204 = vadd.f32 %v180, %v200
    %v205 = vadd.f32 %v181, %v201
    %v206 = vadd.f32 %v182, %v202
    %207 = vset.pattern.permute.xlu0 2
    %208 = vperm.xlu0 %207, %v143
    %v209 = vpop.permute.xlu0 %208
    %211 = vset.pattern.permute.xlu0 2
    %212 = vperm.xlu0 %211, %v144
    %v213 = vpop.permute.xlu0 %212
    %v215 = vlaneseq
    %v216 = vshrl.u32 %v215, 7
    %v217 = vsub.s32 2, %v216
    %v218 = vrot.slane %v141, %v217
    %v219 = vlaneseq
    %v220 = vshrl.u32 %v219, 7
    %v221 = vsub.s32 2, %v220
    %v222 = vrot.slane %v142, %v221
    %v223 = vmul.f32 %v209, %v218
    %v224 = vmul.f32 %v209, %v222
    %v225 = vmul.f32 %v213, %v218
    %v226 = vmul.f32 %v213, %v222
    %v227 = vadd.f32 %v203, %v223
    %v228 = vadd.f32 %v204, %v224
    %v229 = vadd.f32 %v205, %v225
    %v230 = vadd.f32 %v206, %v226
    %231 = vset.pattern.permute.xlu0 3
    %232 = vperm.xlu0 %231, %v143
    %v233 = vpop.permute.xlu0 %232
    %235 = vset.pattern.permute.xlu0 3
    %236 = vperm.xlu0 %235, %v144
    %v237 = vpop.permute.xlu0 %236
    %v239 = vlaneseq
    %v240 = vshrl.u32 %v239, 7
    %v241 = vsub.s32 3, %v240
    %v242 = vrot.slane %v141, %v241
    %v243 = vlaneseq
    %v244 = vshrl.u32 %v243, 7
    %v245 = vsub.s32 3, %v244
    %v246 = vrot.slane %v142, %v245
    %v247 = vmul.f32 %v233, %v242
    %v248 = vmul.f32 %v233, %v246
    %v249 = vmul.f32 %v237, %v242
    %v250 = vmul.f32 %v237, %v246
    %v251 = vadd.f32 %v227, %v247
    %v252 = vadd.f32 %v228, %v248
    %v253 = vadd.f32 %v229, %v249
    %v254 = vadd.f32 %v230, %v250
    %255 = vset.pattern.permute.xlu0 4
    %256 = vperm.xlu0 %255, %v143
    %v257 = vpop.permute.xlu0 %256
    %259 = vset.pattern.permute.xlu0 4
    %260 = vperm.xlu0 %259, %v144
    %v261 = vpop.permute.xlu0 %260
    %v263 = vlaneseq
    %v264 = vshrl.u32 %v263, 7
    %v265 = vsub.s32 4, %v264
    %v266 = vrot.slane %v141, %v265
    %v267 = vlaneseq
    %v268 = vshrl.u32 %v267, 7
    %v269 = vsub.s32 4, %v268
    %v270 = vrot.slane %v142, %v269
    %v271 = vmul.f32 %v257, %v266
    %v272 = vmul.f32 %v257, %v270
    %v273 = vmul.f32 %v261, %v266
    %v274 = vmul.f32 %v261, %v270
    %v275 = vadd.f32 %v251, %v271
    %v276 = vadd.f32 %v252, %v272
    %v277 = vadd.f32 %v253, %v273
    %v278 = vadd.f32 %v254, %v274
    %279 = vset.pattern.permute.xlu0 5
    %280 = vperm.xlu0 %279, %v143
    %v281 = vpop.permute.xlu0 %280
    %283 = vset.pattern.permute.xlu0 5
    %284 = vperm.xlu0 %283, %v144
    %v285 = vpop.permute.xlu0 %284
    %v287 = vlaneseq
    %v288 = vshrl.u32 %v287, 7
    %v289 = vsub.s32 5, %v288
    %v290 = vrot.slane %v141, %v289
    %v291 = vlaneseq
    %v292 = vshrl.u32 %v291, 7
    %v293 = vsub.s32 5, %v292
    %v294 = vrot.slane %v142, %v293
    %v295 = vmul.f32 %v281, %v290
    %v296 = vmul.f32 %v281, %v294
    %v297 = vmul.f32 %v285, %v290
    %v298 = vmul.f32 %v285, %v294
    %v299 = vadd.f32 %v275, %v295
    %v300 = vadd.f32 %v276, %v296
    %v301 = vadd.f32 %v277, %v297
    %v302 = vadd.f32 %v278, %v298
    %303 = vset.pattern.permute.xlu0 6
    %304 = vperm.xlu0 %303, %v143
    %v305 = vpop.permute.xlu0 %304
    %307 = vset.pattern.permute.xlu0 6
    %308 = vperm.xlu0 %307, %v144
    %v309 = vpop.permute.xlu0 %308
    %v311 = vlaneseq
    %v312 = vshrl.u32 %v311, 7
    %v313 = vsub.s32 6, %v312
    %v314 = vrot.slane %v141, %v313
    %v315 = vlaneseq
    %v316 = vshrl.u32 %v315, 7
    %v317 = vsub.s32 6, %v316
    %v318 = vrot.slane %v142, %v317
    %v319 = vmul.f32 %v305, %v314
    %v320 = vmul.f32 %v305, %v318
    %v321 = vmul.f32 %v309, %v314
    %v322 = vmul.f32 %v309, %v318
    %v323 = vadd.f32 %v299, %v319
    %v324 = vadd.f32 %v300, %v320
    %v325 = vadd.f32 %v301, %v321
    %v326 = vadd.f32 %v302, %v322
    %327 = vset.pattern.permute.xlu0 7
    %328 = vperm.xlu0 %327, %v143
    %v329 = vpop.permute.xlu0 %328
    %331 = vset.pattern.permute.xlu0 7
    %332 = vperm.xlu0 %331, %v144
    %v333 = vpop.permute.xlu0 %332
    %v335 = vlaneseq
    %v336 = vshrl.u32 %v335, 7
    %v337 = vsub.s32 7, %v336
    %v338 = vrot.slane %v141, %v337
    %v339 = vlaneseq
    %v340 = vshrl.u32 %v339, 7
    %v341 = vsub.s32 7, %v340
    %v342 = vrot.slane %v142, %v341
    %v343 = vmul.f32 %v329, %v338
    %v344 = vmul.f32 %v329, %v342
    %v345 = vmul.f32 %v333, %v338
    %v346 = vmul.f32 %v333, %v342
    %v347 = vadd.f32 %v323, %v343
    %v348 = vadd.f32 %v324, %v344
    %v349 = vadd.f32 %v325, %v345
    %v350 = vadd.f32 %v326, %v346
    %v351 = vmax.f32 %v347, 0.0
    %v352 = vmax.f32 %v348, 0.0
    %v353 = vmax.f32 %v349, 0.0
    %v354 = vmax.f32 %v350, 0.0
    %v355 = vld [vmem:[%s5] sm:$0x7]
    %v356 = vld [vmem:[%s6] sm:$0x7]
    %358 = vset.pattern.permute.xlu0 0
    %359 = vperm.xlu0 %358, %v355
    %v360 = vpop.permute.xlu0 %359
    %v362 = vlaneseq
    %v363 = vshrl.u32 %v362, 7
    %v364 = vsub.s32 0, %v363
    %v365 = vrot.slane %v351, %v364
    %v366 = vlaneseq
    %v367 = vshrl.u32 %v366, 7
    %v368 = vsub.s32 0, %v367
    %v369 = vrot.slane %v352, %v368
    %v370 = vmul.f32 %v360, %v365
    %v371 = vmul.f32 %v360, %v369
    %373 = vset.pattern.permute.xlu0 0
    %374 = vperm.xlu0 %373, %v356
    %v375 = vpop.permute.xlu0 %374
    %v377 = vadd.f32 %v370, %v375
    %v378 = vadd.f32 %v371, %v375
    %379 = vset.pattern.permute.xlu0 1
    %380 = vperm.xlu0 %379, %v355
    %v381 = vpop.permute.xlu0 %380
    %v383 = vlaneseq
    %v384 = vshrl.u32 %v383, 7
    %v385 = vsub.s32 1, %v384
    %v386 = vrot.slane %v351, %v385
    %v387 = vlaneseq
    %v388 = vshrl.u32 %v387, 7
    %v389 = vsub.s32 1, %v388
    %v390 = vrot.slane %v352, %v389
    %v391 = vmul.f32 %v381, %v386
    %v392 = vmul.f32 %v381, %v390
    %v393 = vadd.f32 %v377, %v391
    %v394 = vadd.f32 %v378, %v392
    %395 = vset.pattern.permute.xlu0 2
    %396 = vperm.xlu0 %395, %v355
    %v397 = vpop.permute.xlu0 %396
    %v399 = vlaneseq
    %v400 = vshrl.u32 %v399, 7
    %v401 = vsub.s32 2, %v400
    %v402 = vrot.slane %v351, %v401
    %v403 = vlaneseq
    %v404 = vshrl.u32 %v403, 7
    %v405 = vsub.s32 2, %v404
    %v406 = vrot.slane %v352, %v405
    %v407 = vmul.f32 %v397, %v402
    %v408 = vmul.f32 %v397, %v406
    %v409 = vadd.f32 %v393, %v407
    %v410 = vadd.f32 %v394, %v408
    %411 = vset.pattern.permute.xlu0 3
    %412 = vperm.xlu0 %411, %v355
    %v413 = vpop.permute.xlu0 %412
    %v415 = vlaneseq
    %v416 = vshrl.u32 %v415, 7
    %v417 = vsub.s32 3, %v416
    %v418 = vrot.slane %v351, %v417
    %v419 = vlaneseq
    %v420 = vshrl.u32 %v419, 7
    %v421 = vsub.s32 3, %v420
    %v422 = vrot.slane %v352, %v421
    %v423 = vmul.f32 %v413, %v418
    %v424 = vmul.f32 %v413, %v422
    %v425 = vadd.f32 %v409, %v423
    %v426 = vadd.f32 %v410, %v424
    %427 = vset.pattern.permute.xlu0 4
    %428 = vperm.xlu0 %427, %v355
    %v429 = vpop.permute.xlu0 %428
    %v431 = vlaneseq
    %v432 = vshrl.u32 %v431, 7
    %v433 = vsub.s32 4, %v432
    %v434 = vrot.slane %v351, %v433
    %v435 = vlaneseq
    %v436 = vshrl.u32 %v435, 7
    %v437 = vsub.s32 4, %v436
    %v438 = vrot.slane %v352, %v437
    %v439 = vmul.f32 %v429, %v434
    %v440 = vmul.f32 %v429, %v438
    %v441 = vadd.f32 %v425, %v439
    %v442 = vadd.f32 %v426, %v440
    %443 = vset.pattern.permute.xlu0 5
    %444 = vperm.xlu0 %443, %v355
    %v445 = vpop.permute.xlu0 %444
    %v447 = vlaneseq
    %v448 = vshrl.u32 %v447, 7
    %v449 = vsub.s32 5, %v448
    %v450 = vrot.slane %v351, %v449
    %v451 = vlaneseq
    %v452 = vshrl.u32 %v451, 7
    %v453 = vsub.s32 5, %v452
    %v454 = vrot.slane %v352, %v453
    %v455 = vmul.f32 %v445, %v450
    %v456 = vmul.f32 %v445, %v454
    %v457 = vadd.f32 %v441, %v455
    %v458 = vadd.f32 %v442, %v456
    %459 = vset.pattern.permute.xlu0 6
    %460 = vperm.xlu0 %459, %v355
    %v461 = vpop.permute.xlu0 %460
    %v463 = vlaneseq
    %v464 = vshrl.u32 %v463, 7
    %v465 = vsub.s32 6, %v464
    %v466 = vrot.slane %v351, %v465
    %v467 = vlaneseq
    %v468 = vshrl.u32 %v467, 7
    %v469 = vsub.s32 6, %v468
    %v470 = vrot.slane %v352, %v469
    %v471 = vmul.f32 %v461, %v466
    %v472 = vmul.f32 %v461, %v470
    %v473 = vadd.f32 %v457, %v471
    %v474 = vadd.f32 %v458, %v472
    %475 = vset.pattern.permute.xlu0 7
    %476 = vperm.xlu0 %475, %v355
    %v477 = vpop.permute.xlu0 %476
    %v479 = vlaneseq
    %v480 = vshrl.u32 %v479, 7
    %v481 = vsub.s32 7, %v480
    %v482 = vrot.slane %v351, %v481
    %v483 = vlaneseq
    %v484 = vshrl.u32 %v483, 7
    %v485 = vsub.s32 7, %v484
    %v486 = vrot.slane %v352, %v485
    %v487 = vmul.f32 %v477, %v482
    %v488 = vmul.f32 %v477, %v486
    %v489 = vadd.f32 %v473, %v487
    %v490 = vadd.f32 %v474, %v488
    %491 = vset.pattern.permute.xlu0 8
    %492 = vperm.xlu0 %491, %v355
    %v493 = vpop.permute.xlu0 %492
    %v495 = vlaneseq
    %v496 = vshrl.u32 %v495, 7
    %v497 = vsub.s32 0, %v496
    %v498 = vrot.slane %v353, %v497
    %v499 = vlaneseq
    %v500 = vshrl.u32 %v499, 7
    %v501 = vsub.s32 0, %v500
    %v502 = vrot.slane %v354, %v501
    %v503 = vmul.f32 %v493, %v498
    %v504 = vmul.f32 %v493, %v502
    %v505 = vadd.f32 %v489, %v503
    %v506 = vadd.f32 %v490, %v504
    %v509 = vcombine.low %v505, %v506
    %511 = vst [vmem:[#allocation2] sm:$0x77] %v509
    // Predicated region
    $region30: #{mlp_forward.1} parent=1 // pred_check
      _
    $region31: #{mlp_forward.1} parent=1 // pred_check_branch
      %513 = sbr.rel (0) target = $region33
    $region32: #{mlp_forward.1} parent=1 // pred_region
      %s515 = ssub.s32 128, 128
      %516 = vsyncadd [#allocation3], %s515
      %s518 = sshll.u32 [#allocation2], 4
      %s519 = int_to_ptr.vmem [resolvable:$true] %s518
      %521 = dma.vmem_to_hbm [thread:$0]  %s519, 128, %s7, [#allocation3]
    $region33: #{mlp_forward.1} parent=1 // pred_fallthru
      _
    // Predicated region
    $region34: #{mlp_forward.1} parent=1 // pred_check
      _
    $region35: #{mlp_forward.1} parent=1 // pred_check_branch
      %523 = sbr.rel (0) target = $region37
    $region36: #{mlp_forward.1} parent=1 // pred_region
      %524 = dma.done [#allocation3], 128
    $region37: #{mlp_forward.1} parent=1 // pred_fallthru
      _
    %525 = vsyncpa [#allocation3], 1

</llo_original>
